<compile_context>
chip_gen: v6e
topology: v6e:2x2x1
jax: 0.10.0
libtpu: 0.0.40
codegen_flags: <defaults>
</compile_context>

<pallas_src>
import functools

import jax
import jax.numpy as jnp
from jax.experimental import pallas as pl
from jax.experimental.pallas import tpu as pltpu


_LANE = 128


def _round_up(x, m):
    return (x + m - 1) // m * m


def _vmem_capacity_bytes():
    try:
        return int(pltpu.get_tpu_info().vmem_capacity_bytes)
    except Exception:
        return 64 << 20  # conservative fallback: v7x physical VMEM per core


def _pipeline_vmem_need(tm, K, C_pad, use_stash, out_bytes, cdt_bytes):
    """Upper bound of double-buffered pipeline VMEM across both passes."""
    patches = 2 * tm * K * cdt_bytes            # pass-1 / pass-2-recompute input
    weight = 2 * K * C_pad * cdt_bytes          # weight (double-buffered default)
    y_stash = (2 * tm * C_pad * 2) if use_stash else 0
    out = 2 * tm * C_pad * out_bytes
    small = 4 * 16 * C_pad * 4 + 4 * C_pad * 4  # stats / gamma / beta
    return patches + weight + y_stash + out + small


def _resolve_tm(requested_tm, M, K, C_pad, use_stash, out_bytes, cdt_bytes, cap):
    m_cap = max(16, min(_round_up(M, 16), 2048))
    if requested_tm is not None:
        return max(16, min(_round_up(requested_tm, 16), m_cap))
    budget = cap // 2  # leave headroom for compiler scratch + the other pass
    for cand in (2048, 1024, 512, 256, 128, 64, 32, 16):
        if cand > m_cap:
            continue
        if _pipeline_vmem_need(cand, K, C_pad, use_stash, out_bytes,
                               cdt_bytes) <= budget:
            return cand
    return 16


def _compiler_params(dimension_semantics, vmem_need, cap):
    # Need-based limit (+25% headroom) instead of a blanket fraction of
    # physical VMEM; keeps full double-buffering comfortable on v7x (64 MiB).
    limit = max(vmem_need + vmem_need // 4, 32 << 20)
    limit = min(limit, cap * 3 // 4)
    return pltpu.CompilerParams(dimension_semantics=dimension_semantics,
                                vmem_limit_bytes=int(limit))


# --------------------------- Pallas kernels ---------------------------------


def _conv_stats_kernel(patches_ref, w_ref, stats_ref, *y_stash_ref,
                       mps, tm, m_valid, ragged):
    """Pass 1: per-channel partial sum / sum-of-squares of the conv output.

    stats_ref is a per-core resident accumulator block (its index depends only
    on the leading 'parallel' grid axis).  Moments are reduced only down to 8
    sublane partials per channel (pure VALU adds, no masked sub-vreg stores);
    the final 8->1 reduce happens once in pass 2.  When y_stash_ref is present
    the bf16 conv tile is also written out so pass 2 does not have to
    re-stream the (much wider) patch matrix.
    """
    c = pl.program_id(0)
    m = pl.program_id(1)

    y = jnp.dot(patches_ref[...], w_ref[...],
                preferred_element_type=jnp.float32)             # [tm, C_pad] f32

    if ragged:
        # Ragged last tile: zero rows >= true M instead of padding M in HBM.
        row0 = (c * mps + m) * tm
        rows = row0 + jax.lax.broadcasted_iota(jnp.int32, y.shape, 0)
        y = jnp.where(rows < m_valid, y, 0.0)

    yr = y.reshape(tm // 8, 8, y.shape[-1])
    psum = jnp.sum(yr, axis=0)                                  # [8, C_pad]
    psq = jnp.sum(yr * yr, axis=0)                              # [8, C_pad]

    @pl.when(m == 0)
    def _init():
        stats_ref[...] = jnp.zeros_like(stats_ref)

    stats_ref[:, 0:8, :] += psum[None]                          # sum partials
    stats_ref[:, 8:16, :] += psq[None]                          # sumsq partials

    if y_stash_ref:
        y_stash_ref[0][...] = y.astype(y_stash_ref[0].dtype)


def _scale_shift(stats, gamma, beta, eps, inv_m):
    """Reduce per-core sublane partials -> per-channel BN scale/shift (f32)."""
    s = jnp.sum(stats, axis=0)                                  # [16, C_pad]
    ssum = jnp.sum(s[0:8, :], axis=0, keepdims=True)            # [1, C_pad]
    ssq = jnp.sum(s[8:16, :], axis=0, keepdims=True)            # [1, C_pad]
    mean = ssum * inv_m
    # Clamp: E[y^2]-E[y]^2 can go slightly negative (cancellation + bf16 err).
    var = jnp.maximum(ssq * inv_m - mean * mean, 0.0)
    scale = gamma * jax.lax.rsqrt(var + eps)
    shift = beta - mean * scale
    return scale, shift


def _bn_apply_from_y_kernel(stats_ref, y_ref, gamma_ref, beta_ref, out_ref,
                            *, eps, inv_m):
    """Pass 2 (large K): read the stashed bf16 conv result, apply batch-norm."""
    scale, shift = _scale_shift(stats_ref[...], gamma_ref[...], beta_ref[...],
                                eps, inv_m)
    y = y_ref[...].astype(jnp.float32)
    out_ref[...] = (y * scale + shift).astype(out_ref.dtype)


def _bn_apply_recompute_kernel(stats_ref, patches_ref, w_ref, gamma_ref,
                               beta_ref, out_ref, *, eps, inv_m):
    """Pass 2 (small K): recompute the cheap conv tile, apply batch-norm."""
    scale, shift = _scale_shift(stats_ref[...], gamma_ref[...], beta_ref[...],
                                eps, inv_m)
    y = jnp.dot(patches_ref[...], w_ref[...],
                preferred_element_type=jnp.float32)
    out_ref[...] = (y * scale + shift).astype(out_ref.dtype)


# ------------------------------ wrapper --------------------------------------


def conv_block_forward(x, weight, gamma, beta, *, stride=1, padding=0,
                       eps=1e-5, tm=None, compute_dtype=jnp.bfloat16,
                       out_dtype=jnp.float32, jvp=None):
    """Forward pass of ConvBlock (conv -> batchnorm), jvp passthrough.

    Args:
      x:      [N, Cin, H, W] float32 (NCHW, matching PyTorch).
      weight: [Cout, Cin, kh, kw].
      gamma, beta: [Cout] BatchNorm affine parameters.
      tm: rows (output pixels) per M-tile; auto-sized from a VMEM budget when
        None.
      compute_dtype: MXU operand precision knob (bf16 default, f32 available).
    Returns:
      (out, jvp_out) with out: [N, Cout, OH, OW]; jvp_out is None (matching
      the module with grad_proj=False and no upstream jvp).
    """
    N, Cin, H, W = x.shape
    Cout, _, kh, kw = weight.shape
    OH = (H + 2 * padding - kh) // stride + 1
    OW = (W + 2 * padding - kw) // stride + 1

    M = N * OH * OW
    K = Cin * kh * kw
    C_pad = _round_up(Cout, _LANE)

    cdt = jnp.dtype(compute_dtype)
    out_itemsize = jnp.dtype(out_dtype).itemsize

    # Adaptive pass-2 strategy: stash y when re-streaming patches is pricier.
    use_stash = K * cdt.itemsize > 2 * C_pad * 2

    cap = _vmem_capacity_bytes()
    tm = _resolve_tm(tm, M, K, C_pad, use_stash, out_itemsize, cdt.itemsize, cap)
    n_m = pl.cdiv(M, tm)
    ragged = (M % tm) != 0

    # Split the moment pass across TensorCores (2 TCs on v7x; harmless on
    # single-TC chips) whenever the M-tile count splits evenly.
    n_split = 2 if (n_m >= 2 and n_m % 2 == 0) else 1
    mps = n_m // n_split

    # ---- glue: NHWC-major im2col (copy-free reshape to [M, K]) ----
    # K order is (kh, kw, Cin): no M x K transpose and no HBM pad of M rows.
    # TODO(synk): move patch construction fully in-kernel (memory_space=pl.ANY
    # on x + halo DMA) to remove the kh*kw HBM read amplification entirely.
    x_nhwc = jnp.transpose(x, (0, 2, 3, 1))
    x_pad = jnp.pad(x_nhwc,
                    ((0, 0), (padding, padding), (padding, padding), (0, 0)))
    cols = []
    for i in range(kh):
        for j in range(kw):
            cols.append(x_pad[:, i:i + stride * OH:stride,
                              j:j + stride * OW:stride, :])     # [N, OH, OW, Cin]
    patches = jnp.concatenate(cols, axis=-1).reshape(M, K).astype(cdt)

    # Weight in matching (kh, kw, Cin) -> Cout layout, Cout lane-padded to 128.
    w2d = jnp.transpose(weight, (2, 3, 1, 0)).reshape(K, Cout)
    w2d = jnp.pad(w2d, ((0, 0), (0, C_pad - Cout))).astype(cdt)
    gamma2d = jnp.pad(gamma.astype(jnp.float32).reshape(1, Cout),
                      ((0, 0), (0, C_pad - Cout)))
    beta2d = jnp.pad(beta.astype(jnp.float32).reshape(1, Cout),
                     ((0, 0), (0, C_pad - Cout)))

    vmem_need = _pipeline_vmem_need(tm, K, C_pad, use_stash, out_itemsize,
                                    cdt.itemsize)
    matmul_flops = 2 * M * K * C_pad
    patch_bytes = M * K * cdt.itemsize
    w_bytes = K * C_pad * cdt.itemsize
    y_bytes = M * C_pad * 2
    out_bytes_total = M * C_pad * out_itemsize

    # ---- pass 1: per-channel moments (per-core resident accumulators) ----
    stats_spec_p1 = pl.BlockSpec((1, 16, C_pad), lambda c, m: (c, 0, 0))
    if use_stash:
        p1_out_shape = (jax.ShapeDtypeStruct((n_split, 16, C_pad), jnp.float32),
                        jax.ShapeDtypeStruct((M, C_pad), jnp.bfloat16))
        p1_out_specs = [stats_spec_p1,
                        pl.BlockSpec((tm, C_pad),
                                     lambda c, m: (c * mps + m, 0))]
    else:
        p1_out_shape = jax.ShapeDtypeStruct((n_split, 16, C_pad), jnp.float32)
        p1_out_specs = stats_spec_p1

    p1 = pl.pallas_call(
        functools.partial(_conv_stats_kernel, mps=mps, tm=tm, m_valid=M,
                          ragged=ragged),
        out_shape=p1_out_shape,
        grid_spec=pltpu.PrefetchScalarGridSpec(
            num_scalar_prefetch=0,
            grid=(n_split, mps),
            in_specs=[
                pl.BlockSpec((tm, K), lambda c, m: (c * mps + m, 0)),
                pl.BlockSpec((K, C_pad), lambda c, m: (0, 0)),
            ],
            out_specs=p1_out_specs,
        ),
        compiler_params=_compiler_params(("parallel", "arbitrary"),
                                         vmem_need, cap),
        cost_estimate=pl.CostEstimate(
            flops=matmul_flops, transcendentals=0,
            bytes_accessed=patch_bytes + w_bytes
            + (y_bytes if use_stash else 0) + n_split * 16 * C_pad * 4),
    )(patches, w2d)

    if use_stash:
        stats, y_stash = p1
    else:
        stats, y_stash = p1, None

    # ---- pass 2: normalize + affine; lane-dense [tm, C_pad] stores ----
    # TODO(synk): single-buffer constant-index operands (pl.Buffered(1)), fuse
    # the two passes behind a leading phase axis, and use 256-wide output
    # tiles on v6e/v7x in compute-bound (large Cout, large K) regimes.
    inv_m = 1.0 / M
    stats_spec = pl.BlockSpec((n_split, 16, C_pad), lambda m: (0, 0, 0))
    const_vec = pl.BlockSpec((1, C_pad), lambda m: (0, 0))
    out_spec2 = pl.BlockSpec((tm, C_pad), lambda m: (m, 0))
    out_shape2 = jax.ShapeDtypeStruct((M, C_pad), out_dtype)
    params2 = _compiler_params(("parallel",), vmem_need, cap)

    if use_stash:
        out2d = pl.pallas_call(
            functools.partial(_bn_apply_from_y_kernel, eps=eps, inv_m=inv_m),
            out_shape=out_shape2,
            grid_spec=pltpu.PrefetchScalarGridSpec(
                num_scalar_prefetch=0,
                grid=(n_m,),
                in_specs=[stats_spec,
                          pl.BlockSpec((tm, C_pad), lambda m: (m, 0)),
                          const_vec, const_vec],
                out_specs=out_spec2,
            ),
            compiler_params=params2,
            cost_estimate=pl.CostEstimate(
                flops=4 * M * C_pad, transcendentals=C_pad * n_m,
                bytes_accessed=y_bytes + out_bytes_total),
        )(stats, y_stash, gamma2d, beta2d)
    else:
        out2d = pl.pallas_call(
            functools.partial(_bn_apply_recompute_kernel, eps=eps, inv_m=inv_m),
            out_shape=out_shape2,
            grid_spec=pltpu.PrefetchScalarGridSpec(
                num_scalar_prefetch=0,
                grid=(n_m,),
                in_specs=[stats_spec,
                          pl.BlockSpec((tm, K), lambda m: (m, 0)),
                          pl.BlockSpec((K, C_pad), lambda m: (0, 0)),
                          const_vec, const_vec],
                out_specs=out_spec2,
            ),
            compiler_params=params2,
            cost_estimate=pl.CostEstimate(
                flops=matmul_flops + 4 * M * C_pad,
                transcendentals=C_pad * n_m,
                bytes_accessed=patch_bytes + w_bytes + out_bytes_total),
        )(stats, patches, w2d, gamma2d, beta2d)

    # TODO(synk): return NHWC (or fuse this layout change into the consumer) to
    # avoid the extra HBM round-trip; NCHW kept to match the module contract.
    out = out2d[:, :Cout].reshape(N, OH, OW, Cout).transpose(0, 3, 1, 2)
    out = out.astype(jnp.float32)

    # grad_proj=False, jvp=None -> jvp_out is None (module passthrough).
    # TODO(synk): grad_proj per-sample Jacobian projection and the BatchNorm2d
    # running_mean/running_var side-effect update are not implemented.
    return out, None


# ------------------------------ reference ------------------------------------


def _reference(x, weight, gamma, beta, *, stride, padding, eps):
    y = jax.lax.conv_general_dilated(
        x, weight, window_strides=(stride, stride),
        padding=[(padding, padding), (padding, padding)],
        dimension_numbers=("NCHW", "OIHW", "NCHW"))
    mean = jnp.mean(y, axis=(0, 2, 3), keepdims=True)
    var = jnp.mean((y - mean) ** 2, axis=(0, 2, 3), keepdims=True)
    return (y - mean) * jax.lax.rsqrt(var + eps) * gamma.reshape(1, -1, 1, 1) \
        + beta.reshape(1, -1, 1, 1)


if __name__ == "__main__":
    key = jax.random.PRNGKey(0)
    k1, k2, k3, k4 = jax.random.split(key, 4)

    # Test 1: small K (=36) -> matmul-recompute pass 2; tm=128 so the toy
    # problem (M = 512) exercises multi-tile moment accumulation with the
    # 2-way core-split grid (n_m = 4, n_split = 2).
    N, Cin, H, W = 2, 4, 16, 16
    Cout, ksize, stride, padding = 8, 3, 1, 1
    x = jax.random.normal(k1, (N, Cin, H, W), dtype=jnp.float32)
    weight = jax.random.normal(k2, (Cout, Cin, ksize, ksize),
                               dtype=jnp.float32) * 0.1
    gamma = jnp.ones((Cout,), jnp.float32)   # BatchNorm2d default init
    beta = jnp.zeros((Cout,), jnp.float32)

    out, jvp_out = conv_block_forward(x, weight, gamma, beta,
                                      stride=stride, padding=padding, tm=128)
    out = jax.block_until_ready(out)
    ref = _reference(x, weight, gamma, beta, stride=stride, padding=padding,
                     eps=1e-5)
    assert out.shape == (N, Cout, H, W)
    # bf16 matmul operands -> compare against the f32 reference with a
    # bf16-appropriate tolerance (outputs are ~unit-scale after batch-norm).
    assert jnp.allclose(out, ref, atol=5e-2, rtol=5e-2), "test1 mismatch"
    assert jvp_out is None

    # Test 2: K = 32*3*3 = 288 > 2*C_pad -> bf16 y-stash path (pass 2 reads
    # the conv result instead of re-streaming the patch matrix).
    N2, Cin2, H2, W2, Cout2 = 1, 32, 8, 8, 8
    x2 = jax.random.normal(k3, (N2, Cin2, H2, W2), dtype=jnp.float32)
    w2 = jax.random.normal(k4, (Cout2, Cin2, ksize, ksize),
                           dtype=jnp.float32) * 0.1
    gamma2 = jnp.ones((Cout2,), jnp.float32)
    beta2 = jnp.zeros((Cout2,), jnp.float32)

    out2, _ = conv_block_forward(x2, w2, gamma2, beta2, stride=1, padding=1,
                                 tm=32)
    out2 = jax.block_until_ready(out2)
    ref2 = _reference(x2, w2, gamma2, beta2, stride=1, padding=1, eps=1e-5)
    assert out2.shape == (N2, Cout2, H2, W2)
    assert jnp.allclose(out2, ref2, atol=5e-2, rtol=5e-2), "test2 mismatch"

    print("KERNEL_OK")
</pallas_src>

<mosaic_0001>
module attributes {stable_mosaic.version = 11 : i64} {
  func.func @_conv_stats_kernel(%arg0: i32, %arg1: i32, %arg2: memref<128x36xbf16, #tpu.memory_space<vmem>>, %arg3: memref<36x128xbf16, #tpu.memory_space<vmem>>, %arg4: memref<1x16x128xf32, #tpu.memory_space<vmem>>) attributes {dimension_semantics = [#tpu.dimension_semantics<parallel>, #tpu.dimension_semantics<arbitrary>], iteration_bounds = array<i64: 2, 2>, scalar_prefetch = 0 : i64, scratch_operands = 0 : i64, tpu.core_type = #tpu.core_type<tc>, window_params = [{transform_indices = @transform_0, window_bounds = array<i64: 128, 36>}, {pipeline_mode = #tpu.pipeline_mode<synchronous>, transform_indices = @transform_1, window_bounds = array<i64: 36, 128>}, {transform_indices = @transform_2, window_bounds = array<i64: 1, 16, 128>}]} {
    %c0 = arith.constant 0 : index
    %c0_0 = arith.constant 0 : index
    %0 = vector.load %arg2[%c0, %c0_0] : memref<128x36xbf16, #tpu.memory_space<vmem>>, vector<128x36xbf16>
    %c0_1 = arith.constant 0 : index
    %c0_2 = arith.constant 0 : index
    %1 = vector.load %arg3[%c0_1, %c0_2] : memref<36x128xbf16, #tpu.memory_space<vmem>>, vector<36x128xbf16>
    %cst = arith.constant dense<0.000000e+00> : vector<128x128xf32>
    %2 = tpu.matmul %0, %1, %cst {dimension_numbers = #tpu.dot_dimension_numbers<[1], [0], [0], [1], [0, 0, 1, 1], [], []>} : vector<128x36xbf16>, vector<36x128xbf16>, vector<128x128xf32> -> vector<128x128xf32>
    %3 = vector.shape_cast %2 : vector<128x128xf32> to vector<16x8x128xf32>
    %cst_3 = arith.constant dense<0.000000e+00> : vector<8x128xf32>
    %4 = vector.multi_reduction <add>, %3, %cst_3 [0] : vector<16x8x128xf32> to vector<8x128xf32>
    %5 = arith.mulf %3, %3 : vector<16x8x128xf32>
    %cst_4 = arith.constant dense<0.000000e+00> : vector<8x128xf32>
    %6 = vector.multi_reduction <add>, %5, %cst_4 [0] : vector<16x8x128xf32> to vector<8x128xf32>
    %c0_i32 = arith.constant 0 : i32
    %7 = arith.cmpi eq, %arg1, %c0_i32 : i32
    %8 = arith.extui %7 : i1 to i32
    %c0_i32_5 = arith.constant 0 : i32
    %9 = arith.cmpi ne, %8, %c0_i32_5 : i32
    scf.if %9 {
      %cst_17 = arith.constant 0.000000e+00 : f32
      %18 = vector.broadcast %cst_17 : f32 to vector<1x16x128xf32>
      %c0_18 = arith.constant 0 : index
      %c0_19 = arith.constant 0 : index
      %c0_20 = arith.constant 0 : index
      %19 = vector.load %arg4[%c0_18, %c0_19, %c0_20] : memref<1x16x128xf32, #tpu.memory_space<vmem>>, vector<1x16x128xf32>
      tpu.vector_store %arg4[%c0_18, %c0_19, %c0_20], %18 {strides = array<i32>} : memref<1x16x128xf32, #tpu.memory_space<vmem>>, vector<1x16x128xf32>,
    } else {
    }
    %c0_6 = arith.constant 0 : index
    %c0_7 = arith.constant 0 : index
    %c0_8 = arith.constant 0 : index
    %10 = vector.load %arg4[%c0_6, %c0_7, %c0_8] : memref<1x16x128xf32, #tpu.memory_space<vmem>>, vector<1x8x128xf32>
    %11 = vector.shape_cast %4 : vector<8x128xf32> to vector<1x8x128xf32>
    %12 = arith.addf %10, %11 : vector<1x8x128xf32>
    %c0_9 = arith.constant 0 : index
    %c0_10 = arith.constant 0 : index
    %c0_11 = arith.constant 0 : index
    %13 = vector.load %arg4[%c0_9, %c0_10, %c0_11] : memref<1x16x128xf32, #tpu.memory_space<vmem>>, vector<1x8x128xf32>
    tpu.vector_store %arg4[%c0_9, %c0_10, %c0_11], %12 {strides = array<i32>} : memref<1x16x128xf32, #tpu.memory_space<vmem>>, vector<1x8x128xf32>,
    %c0_12 = arith.constant 0 : index
    %c8 = arith.constant 8 : index
    %c0_13 = arith.constant 0 : index
    %14 = vector.load %arg4[%c0_12, %c8, %c0_13] : memref<1x16x128xf32, #tpu.memory_space<vmem>>, vector<1x8x128xf32>
    %15 = vector.shape_cast %6 : vector<8x128xf32> to vector<1x8x128xf32>
    %16 = arith.addf %14, %15 : vector<1x8x128xf32>
    %c0_14 = arith.constant 0 : index
    %c8_15 = arith.constant 8 : index
    %c0_16 = arith.constant 0 : index
    %17 = vector.load %arg4[%c0_14, %c8_15, %c0_16] : memref<1x16x128xf32, #tpu.memory_space<vmem>>, vector<1x8x128xf32>
    tpu.vector_store %arg4[%c0_14, %c8_15, %c0_16], %16 {strides = array<i32>} : memref<1x16x128xf32, #tpu.memory_space<vmem>>, vector<1x8x128xf32>,
    return
  }
  func.func @transform_0(%arg0: i32, %arg1: i32) -> (i32, i32) {
    %c2_i32 = arith.constant 2 : i32
    %0 = arith.muli %arg0, %c2_i32 : i32
    %1 = arith.addi %0, %arg1 : i32
    %c0_i32 = arith.constant 0 : i32
    %c0_i32_0 = arith.constant 0 : i32
    return %1, %c0_i32 : i32, i32
  }
  func.func @transform_1(%arg0: i32, %arg1: i32) -> (i32, i32) {
    %c0_i32 = arith.constant 0 : i32
    %c0_i32_0 = arith.constant 0 : i32
    %c0_i32_1 = arith.constant 0 : i32
    return %c0_i32, %c0_i32_0 : i32, i32
  }
  func.func @transform_2(%arg0: i32, %arg1: i32) -> (i32, i32, i32) {
    %c0_i32 = arith.constant 0 : i32
    %c0_i32_0 = arith.constant 0 : i32
    %c0_i32_1 = arith.constant 0 : i32
    return %arg0, %c0_i32, %c0_i32_0 : i32, i32, i32
  }
}

</mosaic_0001>

<llo_original>
// kernel: tpu_custom_call.1
$region0: #{tpu_custom_call.1}
  #allocation0 [shape = 'u32[]', space=smem, size = 0x4, offset = 0x4, fixed_abs, tag = 'smem constant byte address 0x4 - core index']
  #allocation1 [shape = 'u32[144,128]{1,0:T(1,128)}', space=vmem, size = 0x12000, scoped, tag = 'internal scratch']
  %s0 = inlined_call_operand.vmem [shape: bf16[512,36], index: 0, kind: input, shape index: {}]
  %s1 = inlined_call_operand.vmem [shape: bf16[36,128], index: 1, kind: input, shape index: {}]
  %s2 = inlined_call_operand.hbm [shape: f32[2,16,128], index: 2, kind: output, shape index: {}]
  %s3 = sld [smem:[#allocation0]]
  $region45: #{tpu_custom_call.1} parent=0
    _
  %s5 = ssub.s32 1, %s3
  %s6 = scalar_select 0, %s5, %s3
  $region1: #{tpu_custom_call.1} parent=0
    #allocation2 [shape = 'u8[16384]{0}', space=vmem, size = 0x4000, scoped, tag = 'output window, operand 0']
    #allocation3 [shape = 's32[2]{0}', space=sflag, size = 0x8, scoped, tag = 'scoped memory for tpu_custom_call.1']
    %7 = vsyncpa [#allocation3], 0
    %s8 = scalar_lea.sflag [#allocation3], 1
    %9 = vsyncpa %s8, 0
    loop: start=0, step=1, limit=6
    $region2: #{tpu_custom_call.1} parent=1 // loop_pre_header
      _
    $region3: #{tpu_custom_call.1} parent=1 // loop_header
      %s11 = sphi 0, %s15
      %p12 = scmp.ge.s32.totalorder %s11, 6
      %s18 = sphi 0, %s30
      %s19 = sphi 0, %s26
      %s20 = sphi 0, %s18
      %s21 = sphi 0, %s19
      %s22 = sphi 0, %s20
      %s23 = sphi 0, %s21
      %s37 = sphi 0, %s39
      %s40 = sphi 0, %s37
      %s41 = sphi 0, %s40
      %s57 = sphi 0, %s41
      %s61 = sphi 0, %s61
      %s63 = sphi 0, %s61
      %s64 = sphi 0, %s63
      %s78 = sphi 0, %s64
      %s84 = sphi 0, %s86
      %s87 = sphi 0, %s84
      %s88 = sphi 0, %s87
      %s104 = sphi 0, %s88
    $region4: #{tpu_custom_call.1} parent=1 // loop_header_branch
      %14 = sbr.rel (%p12) target = $region8
    $region5: #{tpu_custom_call.1} parent=1 // loop_body
      %s16 = ssub.s32 %s11, 1
      %s17 = ssub.s32 %s11, 2
      %s24 = sadd.s32 1, %s19
      %p25 = scmp.ge.s32.totalorder %s24, 2
      %s26 = scalar_select %p25, 0, %s24
      %s27 = sadd.s32 1, %s18
      %s28 = scalar_select %p25, %s27, %s18
      %p29 = scmp.ge.s32.totalorder %s28, 2
      %s30 = scalar_select %p29, 0, %s28
      %s31 = smul.u32 %s18, 2
      %s32 = sadd.s32 %s31, %s19
      %s33 = smul.u32 %s30, 2
      %s34 = sadd.s32 %s33, %s26
      %s35 = ssub.s32 %s32, %s34
      %p36 = scmp.eq.s32.totalorder %s35, 0
      %s38 = sadd.s32 %s37, 1
      %s39 = scalar_select %p36, %s37, %s38
      %p42 = pneg %p36
      %p43 = scmp.eq.s32.totalorder %s11, 3
      %p44 = por %p42, %p43
      %p45 = scmp.ne.s32.totalorder %s37, %s40
      %p46 = scmp.eq.s32.totalorder %s11, 0
      %p47 = por %p45, %p46
      %p48 = scmp.ne.s32.totalorder %s37, %s40
      %p49 = scmp.eq.s32.totalorder %s16, 3
      %p50 = por %p48, %p49
      %p51 = scmp.ne.s32.totalorder %s40, %s41
      %p52 = scmp.eq.s32.totalorder %s16, 0
      %p53 = por %p51, %p52
      %p54 = scmp.ne.s32.totalorder %s40, %s41
      %p55 = scmp.eq.s32.totalorder %s17, 3
      %p56 = por %p54, %p55
      %p58 = scmp.ne.s32.totalorder %s41, %s57
      %p59 = scmp.eq.s32.totalorder %s17, 0
      %p60 = por %p58, %p59
      %s62 = sadd.s32 %s61, 1
      %p65 = scmp.eq.s32.totalorder %s11, 3
      %p66 = scmp.ne.s32.totalorder %s61, %s63
      %p67 = scmp.eq.s32.totalorder %s11, 0
      %p68 = por %p66, %p67
      %p69 = scmp.ne.s32.totalorder %s61, %s63
      %p70 = scmp.eq.s32.totalorder %s16, 3
      %p71 = por %p69, %p70
      %p72 = scmp.ne.s32.totalorder %s63, %s64
      %p73 = scmp.eq.s32.totalorder %s16, 0
      %p74 = por %p72, %p73
      %p75 = scmp.ne.s32.totalorder %s63, %s64
      %p76 = scmp.eq.s32.totalorder %s17, 3
      %p77 = por %p75, %p76
      %p79 = scmp.ne.s32.totalorder %s64, %s78
      %p80 = scmp.eq.s32.totalorder %s17, 0
      %p81 = por %p79, %p80
      %s82 = ssub.s32 %s18, %s30
      %p83 = scmp.eq.s32.totalorder %s82, 0
      %s85 = sadd.s32 %s84, 1
      %s86 = scalar_select %p83, %s84, %s85
      %p89 = pneg %p83
      %p90 = scmp.eq.s32.totalorder %s11, 3
      %p91 = por %p89, %p90
      %p92 = scmp.ne.s32.totalorder %s84, %s87
      %p93 = scmp.eq.s32.totalorder %s11, 0
      %p94 = por %p92, %p93
      %p95 = scmp.ne.s32.totalorder %s84, %s87
      %p96 = scmp.eq.s32.totalorder %s16, 3
      %p97 = por %p95, %p96
      %p98 = scmp.ne.s32.totalorder %s87, %s88
      %p99 = scmp.eq.s32.totalorder %s16, 0
      %p100 = por %p98, %p99
      %p101 = scmp.ne.s32.totalorder %s87, %s88
      %p102 = scmp.eq.s32.totalorder %s17, 3
      %p103 = por %p101, %p102
      %p105 = scmp.ne.s32.totalorder %s88, %s104
      %p106 = scmp.eq.s32.totalorder %s17, 0
      %p107 = por %p105, %p106
      %p108 = scmp.le.s32.totalorder 1, %s11
      %p109 = scmp.lt.s32.totalorder %s11, 5
      %p110 = pnand %p108, %p109
      %p111 = pneg %p110
      // Predicated region
      $region9: #{tpu_custom_call.1} parent=5 // pred_check
        _
      $region10: #{tpu_custom_call.1} parent=5 // pred_check_branch
        %113 = sbr.rel (%p110) target = $region12
      $region11: #{tpu_custom_call.1} parent=5 // pred_region
        %s114 = ssub.s32 %s11, 1
        // Predicated region
        $region13: #{tpu_custom_call.1} parent=11 // pred_check
          %p115 = pneg %p74
        $region14: #{tpu_custom_call.1} parent=11 // pred_check_branch
          %117 = sbr.rel (%p115) target = $region16
        $region15: #{tpu_custom_call.1} parent=11 // pred_region
          _
        $region16: #{tpu_custom_call.1} parent=11 // pred_fallthru
          _
      $region12: #{tpu_custom_call.1} parent=5 // pred_fallthru
        _
      %p118 = scmp.lt.s32.totalorder %s11, 4
      // Predicated region
      $region17: #{tpu_custom_call.1} parent=5 // pred_check
        %p119 = pneg %p118
      $region18: #{tpu_custom_call.1} parent=5 // pred_check_branch
        %121 = sbr.rel (%p119) target = $region20
      $region19: #{tpu_custom_call.1} parent=5 // pred_region
        // Predicated region
        $region21: #{tpu_custom_call.1} parent=19 // pred_check
          %p122 = pneg %p47
        $region22: #{tpu_custom_call.1} parent=19 // pred_check_branch
          %124 = sbr.rel (%p122) target = $region24
        $region23: #{tpu_custom_call.1} parent=19 // pred_region
          %s125 = smul.u32 %s18, 2
          %s126 = sadd.s32 %s125, %s19
          %s127 = smul.u32 16, %s126
          %p128 = scmp.lt.s32.totalorder %s127, 63
          %s129 = scalar_select %p128, %s127, 63
          %s130 = smul.addr %s129, 4
          %s131 = scalar_lea.vmem %s0, %s130
          %s132 = smul.u32 %s18, 2
          %s133 = sadd.s32 %s132, %s19
          %s134 = smul.u32 16, %s133
        $region24: #{tpu_custom_call.1} parent=19 // pred_fallthru
          _
      $region20: #{tpu_custom_call.1} parent=5 // pred_fallthru
        _
      %p135 = scmp.le.s32.totalorder 1, %s11
      %p136 = scmp.lt.s32.totalorder %s11, 5
      %p137 = pnand %p135, %p136
      %p138 = pneg %p137
      // Predicated region
      $region25: #{tpu_custom_call.1} parent=5 // pred_check
        _
      $region26: #{tpu_custom_call.1} parent=5 // pred_check_branch
        %140 = sbr.rel (%p137) target = $region28
      $region27: #{tpu_custom_call.1} parent=5 // pred_region
        %s141 = ssub.s32 %s11, 1
        %s142 = smul.u32 %s20, 2
        %s143 = sadd.s32 %s142, %s21
        %s144 = smul.u32 16, %s143
        %p145 = scmp.lt.s32.totalorder %s144, 63
        %s146 = scalar_select %p145, %s144, 63
        %s147 = smul.addr %s146, 4
        %s148 = scalar_lea.vmem %s0, %s147
        %p149 = pneg %p53
        %p150 = pneg %p50
        %p151 = pneg %p74
        %p152 = pneg %p71
        %p153 = pneg %p100
        %p154 = pneg %p97
        %s155 = sand.u32 %s87, 1
        %s156 = scalar_lea.sflag [#allocation3], %s155
        %s157 = sand.u32 %s87, 1
        %s158 = smul.addr %s157, 16
        %s159 = scalar_lea.vmem [#allocation2], %s158
        %s160 = smul.u32 %s20, 2
        %s161 = sadd.s32 %s160, %s21
        %s162 = smul.u32 16, %s161
        %p163 = scmp.lt.s32.totalorder %s162, 63
        %s164 = scalar_select %p163, %s162, 63
        %s165 = smul.addr %s164, 4
        %s166 = scalar_lea.vmem %s0, %s165
        %s167 = smul.u32 %s20, 2
        %s168 = sadd.s32 %s167, %s21
        %s169 = smul.u32 16, %s168
        %v171 = vld [vmem:[%s166] sm:$0xf]
        %v172 = vld [vmem:[%s166 + $0x4] sm:$0xf]
        %v173 = vld [vmem:[%s166 + $0x8] sm:$0xf]
        %v174 = vld [vmem:[%s166 + $0xc] sm:$0xf]
        %v175 = vld [vmem:[%s166 + $0x10] sm:$0xf]
        %v176 = vld [vmem:[%s166 + $0x14] sm:$0xf]
        %v177 = vld [vmem:[%s166 + $0x18] sm:$0xf]
        %v178 = vld [vmem:[%s166 + $0x1c] sm:$0xf]
        %v179 = vld [vmem:[%s166 + $0x20] sm:$0xf]
        %v180 = vld [vmem:[%s166 + $0x24] sm:$0xf]
        %v181 = vld [vmem:[%s166 + $0x28] sm:$0xf]
        %v182 = vld [vmem:[%s166 + $0x2c] sm:$0xf]
        %v183 = vld [vmem:[%s166 + $0x30] sm:$0xf]
        %v184 = vld [vmem:[%s166 + $0x34] sm:$0xf]
        %v185 = vld [vmem:[%s166 + $0x38] sm:$0xf]
        %v186 = vld [vmem:[%s166 + $0x3c] sm:$0xf]
        %v187 = vld [vmem:[%s1] sm:$0xf]
        %v188 = vld [vmem:[%s1 + $0x4] sm:$0xf]
        %v189 = vld [vmem:[%s1 + $0x8] sm:$0xf]
        %v190 = vld [vmem:[%s1 + $0xc] sm:$0xf]
        %v191 = vld [vmem:[%s1 + $0x10] sm:$0x3]
        %v208 = vunpack.c.l.b16 %v171
        %v209 = vunpack.c.l.b16 %v172
        %v210 = vunpack.c.l.b16 %v173
        %v211 = vunpack.c.l.b16 %v174
        %v212 = vunpack.c.l.b16 %v175
        %v213 = vunpack.c.l.b16 %v176
        %v214 = vunpack.c.l.b16 %v177
        %v215 = vunpack.c.l.b16 %v178
        %v216 = vunpack.c.l.b16 %v179
        %v217 = vunpack.c.l.b16 %v180
        %v218 = vunpack.c.l.b16 %v181
        %v219 = vunpack.c.l.b16 %v182
        %v220 = vunpack.c.l.b16 %v183
        %v221 = vunpack.c.l.b16 %v184
        %v222 = vunpack.c.l.b16 %v185
        %v223 = vunpack.c.l.b16 %v186
        %v224 = vpack.c.b16 %v209, %v208
        %v225 = vpack.c.b16 %v211, %v210
        %v226 = vpack.c.b16 %v213, %v212
        %v227 = vpack.c.b16 %v215, %v214
        %v228 = vpack.c.b16 %v217, %v216
        %v229 = vpack.c.b16 %v219, %v218
        %v230 = vpack.c.b16 %v221, %v220
        %v231 = vpack.c.b16 %v223, %v222
        %v237 = vunpack.c.l.b16 %v187
        %v238 = vunpack.c.l.b16 %v188
        %v239 = vunpack.c.l.b16 %v189
        %v240 = vunpack.c.l.b16 %v190
        %v241 = vunpack.c.l.b16 %v191
        %v242 = vpack.c.b16 %v238, %v237
        %v243 = vpack.c.b16 %v240, %v239
        %v244 = vpack.c.b16 %v241, %v241
        %vm247 = vcmask 293888
        %v249 = vsel %vm247, %v224, 0
        %v252 = vsel %vm247, %v225, 0
        %v255 = vsel %vm247, %v226, 0
        %v258 = vsel %vm247, %v227, 0
        %v261 = vsel %vm247, %v228, 0
        %v264 = vsel %vm247, %v229, 0
        %v267 = vsel %vm247, %v230, 0
        %v270 = vsel %vm247, %v231, 0
        %vm272 = vcmask 1041408
        %v274 = vsel %vm272, %v244, 0
        %276 = vmatprep.subr.bf16.mxu0 0
        %277 = vmatpush1.bf16.msra.mxu0 0
        %278 = vmatprep.subr.bf16.mxu0 0
        %279 = vmatpush1.bf16.msra.mxu0 0
        %280 = vmatprep.subr.bf16.mxu0 0
        %281 = vmatpush1.bf16.msra.mxu0 0
        %282 = vmatprep.subr.bf16.mxu0 0
        %283 = vmatpush1.bf16.msra.mxu0 0
        %284 = vmatprep.subr.bf16.mxu0 0
        %285 = vmatpush1.bf16.msra.mxu0 0
        %286 = vmatprep.subr.bf16.mxu0 0
        %287 = vmatpush1.bf16.msra.mxu0 %v274
        %288 = vmatprep.subr.bf16.mxu0 0
        %289 = vmatpush1.bf16.msra.mxu0 %v243
        %290 = vmatprep.subr.bf16.mxu0 0
        %291 = vmatpush1.bf16.msra.mxu0 %v242
        %292 = vmatprep.subr.bf16.mxu0 0
        %293 = vmatpush2.bf16.msra.mxu0 0
        %294 = vmatprep.subr.bf16.mxu0 0
        %295 = vmatpush2.bf16.msra.mxu0 0
        %296 = vmatprep.subr.bf16.mxu0 0
        %297 = vmatpush2.bf16.msra.mxu0 0
        %298 = vmatprep.subr.bf16.mxu0 0
        %299 = vmatpush2.bf16.msra.mxu0 0
        %300 = vmatprep.subr.bf16.mxu0 0
        %301 = vmatpush2.bf16.msra.mxu0 0
        %302 = vmatprep.subr.bf16.mxu0 0
        %303 = vmatpush2.bf16.msra.mxu0 0
        %304 = vmatprep.subr.bf16.mxu0 0
        %305 = vmatpush2.bf16.msra.mxu0 0
        %306 = vmatprep.subr.bf16.mxu0 0
        %307 = vmatpush2.bf16.msra.mxu0 0
        %308 = vmatprep.mubr.bf16.mxu0 0
        %309 = vmatmul.mubr.bf16.gmra.mxu0 %v249
        %v310 = vpop.f32.mrf.mxu0
        %v311 = vadd.f32 0.0, %v310
        %v312 = vpop.f32.mrf.mxu0
        %v313 = vpop.f32.mrf.mxu0
        %v314 = vadd.f32 0.0, %v313
        %v315 = vpop.f32.mrf.mxu0
        %316 = vmatprep.mubr.bf16.mxu0 0
        %317 = vmatmul.mubr.bf16.gmra.mxu0 %v252
        %v318 = vpop.f32.mrf.mxu0
        %v319 = vadd.f32 0.0, %v318
        %v320 = vpop.f32.mrf.mxu0
        %v321 = vpop.f32.mrf.mxu0
        %v322 = vadd.f32 0.0, %v321
        %v323 = vpop.f32.mrf.mxu0
        %324 = vmatprep.mubr.bf16.mxu0 0
        %325 = vmatmul.mubr.bf16.gmra.mxu0 %v255
        %v326 = vpop.f32.mrf.mxu0
        %v327 = vadd.f32 0.0, %v326
        %v328 = vpop.f32.mrf.mxu0
        %v329 = vpop.f32.mrf.mxu0
        %v330 = vadd.f32 0.0, %v329
        %v331 = vpop.f32.mrf.mxu0
        %332 = vmatprep.mubr.bf16.mxu0 0
        %333 = vmatmul.mubr.bf16.gmra.mxu0 %v258
        %v334 = vpop.f32.mrf.mxu0
        %v335 = vadd.f32 0.0, %v334
        %v336 = vpop.f32.mrf.mxu0
        %v337 = vpop.f32.mrf.mxu0
        %v338 = vadd.f32 0.0, %v337
        %v339 = vpop.f32.mrf.mxu0
        %340 = vmatprep.mubr.bf16.mxu0 0
        %341 = vmatmul.mubr.bf16.gmra.mxu0 %v261
        %v342 = vpop.f32.mrf.mxu0
        %v343 = vadd.f32 0.0, %v342
        %v344 = vpop.f32.mrf.mxu0
        %v345 = vpop.f32.mrf.mxu0
        %v346 = vadd.f32 0.0, %v345
        %v347 = vpop.f32.mrf.mxu0
        %348 = vmatprep.mubr.bf16.mxu0 0
        %349 = vmatmul.mubr.bf16.gmra.mxu0 %v264
        %v350 = vpop.f32.mrf.mxu0
        %v351 = vadd.f32 0.0, %v350
        %v352 = vpop.f32.mrf.mxu0
        %v353 = vpop.f32.mrf.mxu0
        %v354 = vadd.f32 0.0, %v353
        %v355 = vpop.f32.mrf.mxu0
        %356 = vmatprep.mubr.bf16.mxu0 0
        %357 = vmatmul.mubr.bf16.gmra.mxu0 %v267
        %v358 = vpop.f32.mrf.mxu0
        %v359 = vadd.f32 0.0, %v358
        %v360 = vpop.f32.mrf.mxu0
        %v361 = vpop.f32.mrf.mxu0
        %v362 = vadd.f32 0.0, %v361
        %v363 = vpop.f32.mrf.mxu0
        %364 = vmatprep.mubr.bf16.mxu0 0
        %365 = vmatmul.mubr.bf16.gmra.mxu0 %v270
        %v366 = vpop.f32.mrf.mxu0
        %v367 = vadd.f32 0.0, %v366
        %v368 = vpop.f32.mrf.mxu0
        %v369 = vpop.f32.mrf.mxu0
        %v370 = vadd.f32 0.0, %v369
        %v371 = vpop.f32.mrf.mxu0
        %372 = vdwg.mxu0
        %v373 = vadd.f32 %v311, %v314
        %v374 = vadd.f32 %v373, %v319
        %v375 = vadd.f32 %v374, %v322
        %v376 = vadd.f32 %v375, %v327
        %v377 = vadd.f32 %v376, %v330
        %v378 = vadd.f32 %v377, %v335
        %v379 = vadd.f32 %v378, %v338
        %v380 = vadd.f32 %v379, %v343
        %v381 = vadd.f32 %v380, %v346
        %v382 = vadd.f32 %v381, %v351
        %v383 = vadd.f32 %v382, %v354
        %v384 = vadd.f32 %v383, %v359
        %v385 = vadd.f32 %v384, %v362
        %v386 = vadd.f32 %v385, %v367
        %v387 = vadd.f32 %v386, %v370
        %v388 = vmul.f32 %v311, %v311
        %v389 = vmul.f32 %v314, %v314
        %v390 = vmul.f32 %v319, %v319
        %v391 = vmul.f32 %v322, %v322
        %v392 = vmul.f32 %v327, %v327
        %v393 = vmul.f32 %v330, %v330
        %v394 = vmul.f32 %v335, %v335
        %v395 = vmul.f32 %v338, %v338
        %v396 = vmul.f32 %v343, %v343
        %v397 = vmul.f32 %v346, %v346
        %v398 = vmul.f32 %v351, %v351
        %v399 = vmul.f32 %v354, %v354
        %v400 = vmul.f32 %v359, %v359
        %v401 = vmul.f32 %v362, %v362
        %v402 = vmul.f32 %v367, %v367
        %v403 = vmul.f32 %v370, %v370
        %v404 = vadd.f32 %v388, %v389
        %v405 = vadd.f32 %v404, %v390
        %v406 = vadd.f32 %v405, %v391
        %v407 = vadd.f32 %v406, %v392
        %v408 = vadd.f32 %v407, %v393
        %v409 = vadd.f32 %v408, %v394
        %v410 = vadd.f32 %v409, %v395
        %v411 = vadd.f32 %v410, %v396
        %v412 = vadd.f32 %v411, %v397
        %v413 = vadd.f32 %v412, %v398
        %v414 = vadd.f32 %v413, %v399
        %v415 = vadd.f32 %v414, %v400
        %v416 = vadd.f32 %v415, %v401
        %v417 = vadd.f32 %v416, %v402
        %v418 = vadd.f32 %v417, %v403
        %p419 = scmp.eq.s32.totalorder %s21, 0
        // Predicated region
        $region29: #{tpu_custom_call.1} parent=27 // pred_check
          %p420 = pneg %p419
        $region30: #{tpu_custom_call.1} parent=27 // pred_check_branch
          %422 = sbr.rel (%p420) target = $region32
        $region31: #{tpu_custom_call.1} parent=27 // pred_region
          %423 = vst [vmem:[%s159] sm:$0xff] 0.0
          %424 = vst [vmem:[%s159 + $0x8] sm:$0xff] 0.0
        $region32: #{tpu_custom_call.1} parent=27 // pred_fallthru
          _
        %v425 = vld [vmem:[%s159] sm:$0xff]
        %v426 = vadd.f32 %v425, %v387
        %427 = vst [vmem:[%s159] sm:$0xff] %v426
        %v428 = vld [vmem:[%s159 + $0x8] sm:$0xff]
        %v429 = vadd.f32 %v428, %v418
        %430 = vst [vmem:[%s159 + $0x8] sm:$0xff] %v429
        %s431 = sand.u32 %s87, 1
        %s432 = scalar_lea.sflag [#allocation3], %s431
        %s433 = sand.u32 %s87, 1
        %s434 = smul.addr %s433, 16
        %s435 = scalar_lea.vmem [#allocation2], %s434
        // Predicated region
        $region33: #{tpu_custom_call.1} parent=27 // pred_check
          %p436 = pneg %p97
        $region34: #{tpu_custom_call.1} parent=27 // pred_check_branch
          %438 = sbr.rel (%p436) target = $region36
        $region35: #{tpu_custom_call.1} parent=27 // pred_region
          %s440 = ssub.s32 256, 256
          %441 = vsyncadd %s432, %s440
          %s442 = smul.addr %s20, 2
          %s443 = smul.addr %s442, 128
          %s444 = scalar_lea.hbm %s2, %s443
          %s445 = sshll.u32 %s435, 4
          %s446 = int_to_ptr.vmem [resolvable:$true] %s445
          %451 = dma.vmem_to_hbm [thread:$0]  %s446, 256, %s444, %s432, 128, 128, 8
        $region36: #{tpu_custom_call.1} parent=27 // pred_fallthru
          _
      $region28: #{tpu_custom_call.1} parent=5 // pred_fallthru
        _
      %p452 = scmp.le.s32.totalorder 2, %s11
      // Predicated region
      $region37: #{tpu_custom_call.1} parent=5 // pred_check
        %p453 = pneg %p452
      $region38: #{tpu_custom_call.1} parent=5 // pred_check_branch
        %455 = sbr.rel (%p453) target = $region40
      $region39: #{tpu_custom_call.1} parent=5 // pred_region
        %s456 = ssub.s32 %s11, 2
        // Predicated region
        $region41: #{tpu_custom_call.1} parent=39 // pred_check
          %p457 = pneg %p103
        $region42: #{tpu_custom_call.1} parent=39 // pred_check_branch
          %459 = sbr.rel (%p457) target = $region44
        $region43: #{tpu_custom_call.1} parent=39 // pred_region
          %s460 = sand.u32 %s88, 1
          %s461 = scalar_lea.sflag [#allocation3], %s460
          %s462 = sand.u32 %s88, 1
          %s463 = smul.addr %s462, 16
          %s464 = scalar_lea.vmem [#allocation2], %s463
          %465 = dma.done %s461, 256
        $region44: #{tpu_custom_call.1} parent=39 // pred_fallthru
          _
      $region40: #{tpu_custom_call.1} parent=5 // pred_fallthru
        _
    $region6: #{tpu_custom_call.1} parent=1 // loop_footer
      %s15 = sadd.s32 1, %s11
    $region7: #{tpu_custom_call.1} parent=1 // loop_footer_branch
      %10 = sbr.rel target = $region3
    $region8: #{tpu_custom_call.1} parent=1 // loop_exit
      _
    %466 = vsyncpa [#allocation3], 1
    %s467 = scalar_lea.sflag [#allocation3], 1
    %468 = vsyncpa %s467, 1

</llo_original>
